<compile_context>
chip_gen: v5e
topology: v5e:2x2
jax: 0.10.0
libtpu: 0.0.40
codegen_flags: <defaults>
</compile_context>

<pallas_src>
import functools

import jax
import jax.numpy as jnp
from jax.experimental import pallas as pl
from jax.experimental.pallas import tpu as pltpu


def _stacked_lstm_decode_kernel(x_ref, h0_ref, w_hh_ref, w_ih_ref, b_ref,
                                out_ref, hx_scratch,
                                *, num_layers, hidden_size):
    """One grid step == one decode time step. Weights stay VMEM-resident."""
    H = hidden_size
    t = pl.program_id(0)

    # Initialize the carried hidden state from h0 on the first time step only.
    @pl.when(t == 0)
    def _():
        hx_scratch[...] = h0_ref[...].astype(jnp.float32)

    x_bf = x_ref[0].astype(jnp.bfloat16)                       # (B, H)

    # Hoisted, layer-invariant input projection: ONE wide dot for all layers.
    # (B, H) @ (H, L*4H) -> (B, L*4H), f32 accumulation on the MXU.
    x_gates = jnp.dot(x_bf, w_ih_ref[...],
                      preferred_element_type=jnp.float32)      # (B, L*4H)

    hx = hx_scratch[...]                                       # (B, H) f32

    # Static Python unroll over layers (L is small and compile-time constant),
    # so the x_gates slice below is a zero-cost static lane slice.
    # TODO(synk): for L > ~8 switch to lax.fori_loop to bound vreg live ranges.
    for l in range(num_layers):
        gates = (jnp.dot(hx.astype(jnp.bfloat16), w_hh_ref[l],
                         preferred_element_type=jnp.float32)   # (B, 4H)
                 + x_gates[:, l * 4 * H:(l + 1) * 4 * H]
                 + b_ref[l])                                   # (1, 4H) broadcast

        ingate = jax.nn.sigmoid(gates[:, 0 * H:1 * H])
        forgetgate = jax.nn.sigmoid(gates[:, 1 * H:2 * H])
        cellgate = jnp.tanh(gates[:, 2 * H:3 * H])
        outgate = jax.nn.sigmoid(gates[:, 3 * H:4 * H])

        cy = forgetgate * hx + ingate * cellgate               # matches module (uses hx)
        hx = outgate * jnp.tanh(cy)
        # dropout: inference identity

    hx_scratch[...] = hx                                       # carry to t+1
    out_ref[0] = hx.astype(out_ref.dtype)


def prepare_params(w_ih, w_hh, b_ih, b_hh, param_dtype=jnp.bfloat16):
    """One-time parameter plumbing (do NOT call per decode step).

    w_ih, w_hh: (L, 4H, H) PyTorch layout; b_ih, b_hh: (L, 4H).
    Returns:
      w_hh_t:   (L, H, 4H)   param_dtype, per-layer W_hh^T for hx @ W_hh^T.
      w_ih_all: (H, L*4H)    param_dtype, all layers' W_ih^T concatenated so a
                             single dot produces every layer's input gates.
      b:        (L, 1, 4H)   f32, pre-summed b_ih + b_hh.
    """
    L, fourH, H = w_ih.shape
    w_hh_t = jnp.transpose(w_hh, (0, 2, 1)).astype(param_dtype)        # (L, H, 4H)
    w_ih_all = jnp.transpose(w_ih, (2, 0, 1)).reshape(H, L * fourH)    # (H, L*4H)
    w_ih_all = w_ih_all.astype(param_dtype)
    b = (b_ih + b_hh).astype(jnp.float32).reshape(L, 1, fourH)
    return w_hh_t, w_ih_all, b


@jax.jit
def stacked_lstm_decode(xs, h0, w_hh_t, w_ih_all, b):
    """Run the stacked LSTM step over T decode steps with weights VMEM-resident.

    xs:       (T, B, H)   per-step inputs (each fed identically to every layer)
    h0:       (B, H)      initial hidden state
    w_hh_t:   (L, H, 4H)  from prepare_params
    w_ih_all: (H, L*4H)   from prepare_params
    b:        (L, 1, 4H)  from prepare_params
    returns:  (T, B, H)   hidden state after the full layer stack at each step
    """
    T, B, H = xs.shape
    L = w_hh_t.shape[0]
    fourH = 4 * H
    assert w_hh_t.shape == (L, H, fourH)
    assert w_ih_all.shape == (H, L * fourH)
    assert b.shape == (L, 1, fourH)
    assert h0.shape == (B, H)

    kernel = functools.partial(_stacked_lstm_decode_kernel,
                               num_layers=L, hidden_size=H)

    # VMEM scaling guard: only raise the scoped limit when the resident
    # parameter footprint would exceed the default (keeps v7x's 64 MiB happy).
    itemsize = jnp.dtype(w_hh_t.dtype).itemsize
    param_bytes = (w_hh_t.size + w_ih_all.size) * itemsize + b.size * 4
    io_bytes = (2 * B * H * 4) * 2 * 2 + B * H * 4 * 2          # x/out dbl-buf + h0 + scratch
    needed = 2 * param_bytes + io_bytes + (1 << 20)
    cp_kwargs = dict(dimension_semantics=("arbitrary",))        # hx carried over time
    if needed > (32 << 20):
        cp_kwargs["vmem_limit_bytes"] = int(min(needed, 64 << 20))

    return pl.pallas_call(
        kernel,
        out_shape=jax.ShapeDtypeStruct((T, B, H), xs.dtype),
        grid_spec=pltpu.PrefetchScalarGridSpec(
            num_scalar_prefetch=0,
            grid=(T,),
            in_specs=[
                pl.BlockSpec((1, B, H), lambda t: (t, 0, 0)),            # x_t (streamed)
                pl.BlockSpec((B, H), lambda t: (0, 0)),                  # h0 (resident)
                pl.BlockSpec((L, H, fourH), lambda t: (0, 0, 0)),        # W_hh^T (resident)
                pl.BlockSpec((H, L * fourH), lambda t: (0, 0)),          # W_ih^T all (resident)
                pl.BlockSpec((L, 1, fourH), lambda t: (0, 0, 0)),        # bias (resident)
            ],
            out_specs=pl.BlockSpec((1, B, H), lambda t: (t, 0, 0)),      # h_t
            scratch_shapes=[pltpu.VMEM((B, H), jnp.float32)],            # carried hx
        ),
        compiler_params=pltpu.CompilerParams(**cp_kwargs),
    )(xs, h0, w_hh_t, w_ih_all, b)


def stacked_lstm_step(x, h0, w_hh_t, w_ih_all, b):
    """Single StackedLSTMStep.forward == the T=1 case of the decode kernel."""
    return stacked_lstm_decode(x[None], h0, w_hh_t, w_ih_all, b)[0]


def stacked_lstm_step_ref(x, h0, w_ih, w_hh, b_ih, b_hh):
    """Pure-JAX reference mirroring the PyTorch module (f32 throughout)."""
    L = w_ih.shape[0]
    H = w_hh.shape[2]
    hx = h0
    for l in range(L):
        gates = hx @ w_hh[l].T + b_hh[l] + x @ w_ih[l].T + b_ih[l]
        i = jax.nn.sigmoid(gates[:, 0 * H:1 * H])
        f = jax.nn.sigmoid(gates[:, 1 * H:2 * H])
        g = jnp.tanh(gates[:, 2 * H:3 * H])
        o = jax.nn.sigmoid(gates[:, 3 * H:4 * H])
        cy = f * hx + i * g
        hx = o * jnp.tanh(cy)
        # dropout: inference identity
    return hx


if __name__ == "__main__":
    num_layers = 2
    hidden_size = 32
    input_size = hidden_size     # required by the module for num_layers > 1
    batch = 4
    T = 6                        # decode steps for the amortized path
    dropout = 0.1                # inference mode -> identity

    key = jax.random.PRNGKey(0)
    k = jax.random.split(key, 7)
    bound = 1.0 / (hidden_size ** 0.5)   # PyTorch RNNCellBase init range

    x = jax.random.normal(k[0], (batch, input_size), dtype=jnp.float32)
    h0 = jax.random.normal(k[1], (batch, hidden_size), dtype=jnp.float32)
    w_ih = jax.random.uniform(k[2], (num_layers, 4 * hidden_size, input_size),
                              minval=-bound, maxval=bound, dtype=jnp.float32)
    w_hh = jax.random.uniform(k[3], (num_layers, 4 * hidden_size, hidden_size),
                              minval=-bound, maxval=bound, dtype=jnp.float32)
    b_ih = jax.random.uniform(k[4], (num_layers, 4 * hidden_size),
                              minval=-bound, maxval=bound, dtype=jnp.float32)
    b_hh = jax.random.uniform(k[5], (num_layers, 4 * hidden_size),
                              minval=-bound, maxval=bound, dtype=jnp.float32)
    xs = jax.random.normal(k[6], (T, batch, input_size), dtype=jnp.float32)

    # Parameter prep happens ONCE (not per decode step).
    w_hh_t, w_ih_all, b = prepare_params(w_ih, w_hh, b_ih, b_hh)

    # --- single module forward (the original spec) ---
    out = stacked_lstm_step(x, h0, w_hh_t, w_ih_all, b)
    out = jax.block_until_ready(out)
    ref = stacked_lstm_step_ref(x, h0, w_ih, w_hh, b_ih, b_hh)
    assert out.shape == (batch, hidden_size)
    # bf16 weight streaming vs f32 reference -> slightly looser tolerance.
    assert jnp.allclose(out, ref, atol=2e-2, rtol=2e-2), "single-step mismatch"

    # --- amortized decode over T steps (weights resident, hx carried) ---
    outs = stacked_lstm_decode(xs, h0, w_hh_t, w_ih_all, b)
    outs = jax.block_until_ready(outs)
    hx_ref = h0
    for t in range(T):
        hx_ref = stacked_lstm_step_ref(xs[t], hx_ref, w_ih, w_hh, b_ih, b_hh)
        assert jnp.allclose(outs[t], hx_ref, atol=2e-2, rtol=2e-2), \
            f"decode mismatch at step {t}"

    print("KERNEL_OK")
</pallas_src>

<mosaic_0001>
module attributes {stable_mosaic.version = 11 : i64} {
  func.func @_stacked_lstm_decode_kernel(%arg0: i32, %arg1: memref<1x4x32xf32, #tpu.memory_space<vmem>>, %arg2: memref<4x32xf32, #tpu.memory_space<vmem>>, %arg3: memref<2x32x128xbf16, #tpu.memory_space<vmem>>, %arg4: memref<32x256xbf16, #tpu.memory_space<vmem>>, %arg5: memref<2x1x128xf32, #tpu.memory_space<vmem>>, %arg6: memref<1x4x32xf32, #tpu.memory_space<vmem>>, %arg7: memref<4x32xf32, #tpu.memory_space<vmem>>) attributes {dimension_semantics = [#tpu.dimension_semantics<arbitrary>], iteration_bounds = array<i64: 1>, scalar_prefetch = 0 : i64, scratch_operands = 1 : i64, tpu.core_type = #tpu.core_type<tc>, window_params = [{transform_indices = @transform_0, window_bounds = array<i64: 1, 4, 32>}, {pipeline_mode = #tpu.pipeline_mode<synchronous>, transform_indices = @transform_1, window_bounds = array<i64: 4, 32>}, {pipeline_mode = #tpu.pipeline_mode<synchronous>, transform_indices = @transform_2, window_bounds = array<i64: 2, 32, 128>}, {pipeline_mode = #tpu.pipeline_mode<synchronous>, transform_indices = @transform_3, window_bounds = array<i64: 32, 256>}, {pipeline_mode = #tpu.pipeline_mode<synchronous>, transform_indices = @transform_4, window_bounds = array<i64: 2, 1, 128>}, {transform_indices = @transform_5, window_bounds = array<i64: 1, 4, 32>}]} {
    %c0_i32 = arith.constant 0 : i32
    %0 = arith.cmpi eq, %arg0, %c0_i32 : i32
    %1 = arith.extui %0 : i1 to i32
    %c0_i32_0 = arith.constant 0 : i32
    %2 = arith.cmpi ne, %1, %c0_i32_0 : i32
    scf.if %2 {
      %c0_31 = arith.constant 0 : index
      %c0_32 = arith.constant 0 : index
      %83 = vector.load %arg2[%c0_31, %c0_32] : memref<4x32xf32, #tpu.memory_space<vmem>>, vector<4x32xf32>
      %c0_33 = arith.constant 0 : index
      %c0_34 = arith.constant 0 : index
      %84 = vector.load %arg7[%c0_33, %c0_34] : memref<4x32xf32, #tpu.memory_space<vmem>>, vector<4x32xf32>
      tpu.vector_store %arg7[%c0_33, %c0_34], %83 {strides = array<i32>} : memref<4x32xf32, #tpu.memory_space<vmem>>, vector<4x32xf32>,
    } else {
    }
    %c0 = arith.constant 0 : index
    %c0_1 = arith.constant 0 : index
    %c0_2 = arith.constant 0 : index
    %3 = vector.load %arg1[%c0, %c0_1, %c0_2] : memref<1x4x32xf32, #tpu.memory_space<vmem>>, vector<1x4x32xf32>
    %4 = vector.shape_cast %3 : vector<1x4x32xf32> to vector<4x32xf32>
    %5 = arith.truncf %4 : vector<4x32xf32> to vector<4x32xbf16>
    %c0_3 = arith.constant 0 : index
    %c0_4 = arith.constant 0 : index
    %6 = vector.load %arg4[%c0_3, %c0_4] : memref<32x256xbf16, #tpu.memory_space<vmem>>, vector<32x256xbf16>
    %cst = arith.constant dense<0.000000e+00> : vector<4x256xf32>
    %7 = tpu.matmul %5, %6, %cst {dimension_numbers = #tpu.dot_dimension_numbers<[1], [0], [0], [1], [0, 0, 1, 1], [], []>} : vector<4x32xbf16>, vector<32x256xbf16>, vector<4x256xf32> -> vector<4x256xf32>
    %c0_5 = arith.constant 0 : index
    %c0_6 = arith.constant 0 : index
    %8 = vector.load %arg7[%c0_5, %c0_6] : memref<4x32xf32, #tpu.memory_space<vmem>>, vector<4x32xf32>
    %9 = arith.truncf %8 : vector<4x32xf32> to vector<4x32xbf16>
    %c0_7 = arith.constant 0 : index
    %c0_8 = arith.constant 0 : index
    %c0_9 = arith.constant 0 : index
    %10 = vector.load %arg3[%c0_7, %c0_8, %c0_9] : memref<2x32x128xbf16, #tpu.memory_space<vmem>>, vector<1x32x128xbf16>
    %11 = vector.shape_cast %10 : vector<1x32x128xbf16> to vector<32x128xbf16>
    %cst_10 = arith.constant dense<0.000000e+00> : vector<4x128xf32>
    %12 = tpu.matmul %9, %11, %cst_10 {dimension_numbers = #tpu.dot_dimension_numbers<[1], [0], [0], [1], [0, 0, 1, 1], [], []>} : vector<4x32xbf16>, vector<32x128xbf16>, vector<4x128xf32> -> vector<4x128xf32>
    %13 = vector.extract_strided_slice %7 {offsets = [0, 0], sizes = [4, 128], strides = [1, 1]} : vector<4x256xf32> to vector<4x128xf32>
    %14 = arith.addf %12, %13 : vector<4x128xf32>
    %c0_11 = arith.constant 0 : index
    %c0_12 = arith.constant 0 : index
    %c0_13 = arith.constant 0 : index
    %15 = vector.load %arg5[%c0_11, %c0_12, %c0_13] : memref<2x1x128xf32, #tpu.memory_space<vmem>>, vector<1x1x128xf32>
    %16 = vector.shape_cast %15 : vector<1x1x128xf32> to vector<1x128xf32>
    %17 = vector.broadcast %16 : vector<1x128xf32> to vector<4x128xf32>
    %18 = arith.addf %14, %17 : vector<4x128xf32>
    %19 = vector.extract_strided_slice %18 {offsets = [0, 0], sizes = [4, 32], strides = [1, 1]} : vector<4x128xf32> to vector<4x32xf32>
    %20 = arith.negf %19 : vector<4x32xf32>
    %21 = math.exp %20 : vector<4x32xf32>
    %cst_14 = arith.constant 1.000000e+00 : f32
    %22 = vector.broadcast %cst_14 : f32 to vector<4x32xf32>
    %23 = arith.addf %22, %21 : vector<4x32xf32>
    %24 = arith.divf %22, %23 : vector<4x32xf32>
    %25 = vector.extract_strided_slice %18 {offsets = [0, 32], sizes = [4, 32], strides = [1, 1]} : vector<4x128xf32> to vector<4x32xf32>
    %26 = arith.negf %25 : vector<4x32xf32>
    %27 = math.exp %26 : vector<4x32xf32>
    %cst_15 = arith.constant 1.000000e+00 : f32
    %28 = vector.broadcast %cst_15 : f32 to vector<4x32xf32>
    %29 = arith.addf %28, %27 : vector<4x32xf32>
    %30 = arith.divf %28, %29 : vector<4x32xf32>
    %31 = vector.extract_strided_slice %18 {offsets = [0, 64], sizes = [4, 32], strides = [1, 1]} : vector<4x128xf32> to vector<4x32xf32>
    %32 = math.tanh %31 : vector<4x32xf32>
    %33 = vector.extract_strided_slice %18 {offsets = [0, 96], sizes = [4, 32], strides = [1, 1]} : vector<4x128xf32> to vector<4x32xf32>
    %34 = arith.negf %33 : vector<4x32xf32>
    %35 = math.exp %34 : vector<4x32xf32>
    %cst_16 = arith.constant 1.000000e+00 : f32
    %36 = vector.broadcast %cst_16 : f32 to vector<4x32xf32>
    %37 = arith.addf %36, %35 : vector<4x32xf32>
    %38 = arith.divf %36, %37 : vector<4x32xf32>
    %39 = arith.mulf %30, %8 : vector<4x32xf32>
    %40 = arith.mulf %24, %32 : vector<4x32xf32>
    %41 = arith.addf %39, %40 : vector<4x32xf32>
    %42 = math.tanh %41 : vector<4x32xf32>
    %43 = arith.mulf %38, %42 : vector<4x32xf32>
    %44 = arith.truncf %43 : vector<4x32xf32> to vector<4x32xbf16>
    %c1 = arith.constant 1 : index
    %c0_17 = arith.constant 0 : index
    %c0_18 = arith.constant 0 : index
    %45 = vector.load %arg3[%c1, %c0_17, %c0_18] : memref<2x32x128xbf16, #tpu.memory_space<vmem>>, vector<1x32x128xbf16>
    %46 = vector.shape_cast %45 : vector<1x32x128xbf16> to vector<32x128xbf16>
    %cst_19 = arith.constant dense<0.000000e+00> : vector<4x128xf32>
    %47 = tpu.matmul %44, %46, %cst_19 {dimension_numbers = #tpu.dot_dimension_numbers<[1], [0], [0], [1], [0, 0, 1, 1], [], []>} : vector<4x32xbf16>, vector<32x128xbf16>, vector<4x128xf32> -> vector<4x128xf32>
    %48 = vector.extract_strided_slice %7 {offsets = [0, 128], sizes = [4, 128], strides = [1, 1]} : vector<4x256xf32> to vector<4x128xf32>
    %49 = arith.addf %47, %48 : vector<4x128xf32>
    %c1_20 = arith.constant 1 : index
    %c0_21 = arith.constant 0 : index
    %c0_22 = arith.constant 0 : index
    %50 = vector.load %arg5[%c1_20, %c0_21, %c0_22] : memref<2x1x128xf32, #tpu.memory_space<vmem>>, vector<1x1x128xf32>
    %51 = vector.shape_cast %50 : vector<1x1x128xf32> to vector<1x128xf32>
    %52 = vector.broadcast %51 : vector<1x128xf32> to vector<4x128xf32>
    %53 = arith.addf %49, %52 : vector<4x128xf32>
    %54 = vector.extract_strided_slice %53 {offsets = [0, 0], sizes = [4, 32], strides = [1, 1]} : vector<4x128xf32> to vector<4x32xf32>
    %55 = arith.negf %54 : vector<4x32xf32>
    %56 = math.exp %55 : vector<4x32xf32>
    %cst_23 = arith.constant 1.000000e+00 : f32
    %57 = vector.broadcast %cst_23 : f32 to vector<4x32xf32>
    %58 = arith.addf %57, %56 : vector<4x32xf32>
    %59 = arith.divf %57, %58 : vector<4x32xf32>
    %60 = vector.extract_strided_slice %53 {offsets = [0, 32], sizes = [4, 32], strides = [1, 1]} : vector<4x128xf32> to vector<4x32xf32>
    %61 = arith.negf %60 : vector<4x32xf32>
    %62 = math.exp %61 : vector<4x32xf32>
    %cst_24 = arith.constant 1.000000e+00 : f32
    %63 = vector.broadcast %cst_24 : f32 to vector<4x32xf32>
    %64 = arith.addf %63, %62 : vector<4x32xf32>
    %65 = arith.divf %63, %64 : vector<4x32xf32>
    %66 = vector.extract_strided_slice %53 {offsets = [0, 64], sizes = [4, 32], strides = [1, 1]} : vector<4x128xf32> to vector<4x32xf32>
    %67 = math.tanh %66 : vector<4x32xf32>
    %68 = vector.extract_strided_slice %53 {offsets = [0, 96], sizes = [4, 32], strides = [1, 1]} : vector<4x128xf32> to vector<4x32xf32>
    %69 = arith.negf %68 : vector<4x32xf32>
    %70 = math.exp %69 : vector<4x32xf32>
    %cst_25 = arith.constant 1.000000e+00 : f32
    %71 = vector.broadcast %cst_25 : f32 to vector<4x32xf32>
    %72 = arith.addf %71, %70 : vector<4x32xf32>
    %73 = arith.divf %71, %72 : vector<4x32xf32>
    %74 = arith.mulf %65, %43 : vector<4x32xf32>
    %75 = arith.mulf %59, %67 : vector<4x32xf32>
    %76 = arith.addf %74, %75 : vector<4x32xf32>
    %77 = math.tanh %76 : vector<4x32xf32>
    %78 = arith.mulf %73, %77 : vector<4x32xf32>
    %c0_26 = arith.constant 0 : index
    %c0_27 = arith.constant 0 : index
    %79 = vector.load %arg7[%c0_26, %c0_27] : memref<4x32xf32, #tpu.memory_space<vmem>>, vector<4x32xf32>
    tpu.vector_store %arg7[%c0_26, %c0_27], %78 {strides = array<i32>} : memref<4x32xf32, #tpu.memory_space<vmem>>, vector<4x32xf32>,
    %c0_28 = arith.constant 0 : index
    %c0_29 = arith.constant 0 : index
    %c0_30 = arith.constant 0 : index
    %80 = vector.load %arg6[%c0_28, %c0_29, %c0_30] : memref<1x4x32xf32, #tpu.memory_space<vmem>>, vector<1x4x32xf32>
    %81 = vector.shape_cast %80 : vector<1x4x32xf32> to vector<4x32xf32>
    %82 = vector.shape_cast %78 : vector<4x32xf32> to vector<1x4x32xf32>
    tpu.vector_store %arg6[%c0_28, %c0_29, %c0_30], %82 {strides = array<i32>} : memref<1x4x32xf32, #tpu.memory_space<vmem>>, vector<1x4x32xf32>,
    return
  }
  func.func @transform_0(%arg0: i32) -> (i32, i32, i32) {
    %c0_i32 = arith.constant 0 : i32
    %c0_i32_0 = arith.constant 0 : i32
    %c0_i32_1 = arith.constant 0 : i32
    return %arg0, %c0_i32, %c0_i32_0 : i32, i32, i32
  }
  func.func @transform_1(%arg0: i32) -> (i32, i32) {
    %c0_i32 = arith.constant 0 : i32
    %c0_i32_0 = arith.constant 0 : i32
    %c0_i32_1 = arith.constant 0 : i32
    return %c0_i32, %c0_i32_0 : i32, i32
  }
  func.func @transform_2(%arg0: i32) -> (i32, i32, i32) {
    %c0_i32 = arith.constant 0 : i32
    %c0_i32_0 = arith.constant 0 : i32
    %c0_i32_1 = arith.constant 0 : i32
    %c0_i32_2 = arith.constant 0 : i32
    return %c0_i32, %c0_i32_0, %c0_i32_1 : i32, i32, i32
  }
  func.func @transform_3(%arg0: i32) -> (i32, i32) {
    %c0_i32 = arith.constant 0 : i32
    %c0_i32_0 = arith.constant 0 : i32
    %c0_i32_1 = arith.constant 0 : i32
    return %c0_i32, %c0_i32_0 : i32, i32
  }
  func.func @transform_4(%arg0: i32) -> (i32, i32, i32) {
    %c0_i32 = arith.constant 0 : i32
    %c0_i32_0 = arith.constant 0 : i32
    %c0_i32_1 = arith.constant 0 : i32
    %c0_i32_2 = arith.constant 0 : i32
    return %c0_i32, %c0_i32_0, %c0_i32_1 : i32, i32, i32
  }
  func.func @transform_5(%arg0: i32) -> (i32, i32, i32) {
    %c0_i32 = arith.constant 0 : i32
    %c0_i32_0 = arith.constant 0 : i32
    %c0_i32_1 = arith.constant 0 : i32
    return %arg0, %c0_i32, %c0_i32_0 : i32, i32, i32
  }
}

</mosaic_0001>

<llo_original>
// kernel: stacked_lstm_decode.1
$region0: #{stacked_lstm_decode.1}
  #allocation0 [shape = 'u32[]', space=smem, size = 0x4, offset = 0x4, fixed_abs, tag = 'smem constant byte address 0x4 - core index']
  #allocation1 [shape = 'u32[72,128]{1,0:T(1,128)}', space=vmem, size = 0x9000, scoped, tag = 'internal scratch']
  #allocation2 [shape = 'f32[4,32]{1,0:T(4,128)}', space=vmem, size = 0x800, scoped, tag = 'scratch operand']
  %s0 = inlined_call_operand.hbm [shape: f32[1,4,32], index: 0, kind: input, shape index: {}]
  %s1 = inlined_call_operand.hbm [shape: f32[4,32], index: 1, kind: input, shape index: {}]
  %s2 = inlined_call_operand.hbm [shape: bf16[2,32,128], index: 2, kind: input, shape index: {}]
  %s3 = inlined_call_operand.hbm [shape: bf16[32,256], index: 3, kind: input, shape index: {}]
  %s4 = inlined_call_operand.vmem [shape: f32[2,1,128], index: 4, kind: input, shape index: {}]
  %s5 = inlined_call_operand.hbm [shape: f32[1,4,32], index: 5, kind: output, shape index: {}]
  %s6 = sld [smem:[#allocation0]]
  $region50: #{stacked_lstm_decode.1} parent=0
    _
  %s8 = ssub.s32 1, %s6
  %s9 = scalar_select 0, %s8, %s6
  $region1: #{stacked_lstm_decode.1} parent=0
    #allocation3 [shape = 'u8[2048]{0}', space=vmem, size = 0x800, scoped, tag = 'input window, operand 0, single buffered']
    #allocation4 [shape = 's32[1]{0}', space=sflag, size = 0x4, scoped, tag = 'scoped memory for stacked_lstm_decode.1']
    #allocation5 [shape = 's32[1]{0}', space=sflag, size = 0x4, scoped, tag = 'scoped memory for stacked_lstm_decode.1']
    #allocation6 [shape = 'u8[2048]{0}', space=vmem, size = 0x800, scoped, tag = 'input window, operand 1, single buffered']
    #allocation7 [shape = 's32[1]{0}', space=sflag, size = 0x4, scoped, tag = 'scoped memory for stacked_lstm_decode.1']
    #allocation8 [shape = 'u8[16384]{0}', space=vmem, size = 0x4000, scoped, tag = 'input window, operand 2, single buffered']
    #allocation9 [shape = 'u8[16384]{0}', space=vmem, size = 0x4000, scoped, tag = 'input window, operand 3, single buffered']
    #allocation10 [shape = 's32[1]{0}', space=sflag, size = 0x4, scoped, tag = 'scoped memory for stacked_lstm_decode.1']
    #allocation11 [shape = 'u8[2048]{0}', space=vmem, size = 0x800, scoped, tag = 'output window, operand 0, single buffered']
    %10 = vsyncpa [#allocation4], 0
    %11 = vsyncpa [#allocation7], 0
    %12 = vsyncpa [#allocation10], 0
    %13 = vsyncpa [#allocation5], 0
    // Predicated region
    $region2: #{stacked_lstm_decode.1} parent=1 // pred_check
      _
    $region3: #{stacked_lstm_decode.1} parent=1 // pred_check_branch
      %15 = sbr.rel (0) target = $region5
    $region4: #{stacked_lstm_decode.1} parent=1 // pred_region
      %17 = vsyncadd [#allocation4], 0
      %s19 = sshll.u32 %s0, 4
      %s20 = int_to_ptr.hbm [resolvable:$true] %s19
      %s21 = sshll.u32 [#allocation3], 4
      %s22 = int_to_ptr.vmem [resolvable:$true] %s21
      %24 = dma.hbm_to_vmem [thread:$0]  %s20, 64, %s22, [#allocation4]
    $region5: #{stacked_lstm_decode.1} parent=1 // pred_fallthru
      _
    // Predicated region
    $region6: #{stacked_lstm_decode.1} parent=1 // pred_check
      _
    $region7: #{stacked_lstm_decode.1} parent=1 // pred_check_branch
      %26 = sbr.rel (0) target = $region9
    $region8: #{stacked_lstm_decode.1} parent=1 // pred_region
      %28 = vsyncadd [#allocation7], 0
      %s30 = sshll.u32 %s1, 4
      %s31 = int_to_ptr.hbm [resolvable:$true] %s30
      %s32 = sshll.u32 [#allocation6], 4
      %s33 = int_to_ptr.vmem [resolvable:$true] %s32
      %35 = dma.hbm_to_vmem [thread:$0]  %s31, 64, %s33, [#allocation7]
    $region9: #{stacked_lstm_decode.1} parent=1 // pred_fallthru
      _
    // Predicated region
    $region10: #{stacked_lstm_decode.1} parent=1 // pred_check
      _
    $region11: #{stacked_lstm_decode.1} parent=1 // pred_check_branch
      %37 = sbr.rel (0) target = $region13
    $region12: #{stacked_lstm_decode.1} parent=1 // pred_region
      %39 = vsyncadd [#allocation7], 0
      %s40 = sshll.u32 %s2, 4
      %s41 = int_to_ptr.hbm [resolvable:$true] %s40
      %s42 = sshll.u32 [#allocation8], 4
      %s43 = int_to_ptr.vmem [resolvable:$true] %s42
      %48 = dma.hbm_to_vmem [thread:$0]  %s41, 512, %s43, [#allocation7], 64, 64, 4
    $region13: #{stacked_lstm_decode.1} parent=1 // pred_fallthru
      _
    // Predicated region
    $region14: #{stacked_lstm_decode.1} parent=1 // pred_check
      _
    $region15: #{stacked_lstm_decode.1} parent=1 // pred_check_branch
      %50 = sbr.rel (0) target = $region17
    $region16: #{stacked_lstm_decode.1} parent=1 // pred_region
      %52 = vsyncadd [#allocation10], 0
      %s53 = sshll.u32 %s3, 4
      %s54 = int_to_ptr.hbm [resolvable:$true] %s53
      %s55 = sshll.u32 [#allocation9], 4
      %s56 = int_to_ptr.vmem [resolvable:$true] %s55
      %61 = dma.hbm_to_vmem [thread:$0]  %s54, 512, %s56, [#allocation10], 128, 128, 8
    $region17: #{stacked_lstm_decode.1} parent=1 // pred_fallthru
      _
    // Predicated region
    $region18: #{stacked_lstm_decode.1} parent=1 // pred_check
      _
    $region19: #{stacked_lstm_decode.1} parent=1 // pred_check_branch
      %63 = sbr.rel (0) target = $region21
    $region20: #{stacked_lstm_decode.1} parent=1 // pred_region
      _
    $region21: #{stacked_lstm_decode.1} parent=1 // pred_fallthru
      _
    // Predicated region
    $region22: #{stacked_lstm_decode.1} parent=1 // pred_check
      _
    $region23: #{stacked_lstm_decode.1} parent=1 // pred_check_branch
      %65 = sbr.rel (0) target = $region25
    $region24: #{stacked_lstm_decode.1} parent=1 // pred_region
      %67 = dma.done [#allocation4], 64
    $region25: #{stacked_lstm_decode.1} parent=1 // pred_fallthru
      _
    // Predicated region
    $region26: #{stacked_lstm_decode.1} parent=1 // pred_check
      _
    $region27: #{stacked_lstm_decode.1} parent=1 // pred_check_branch
      %69 = sbr.rel (0) target = $region29
    $region28: #{stacked_lstm_decode.1} parent=1 // pred_region
      %71 = dma.done [#allocation7], 64
    $region29: #{stacked_lstm_decode.1} parent=1 // pred_fallthru
      _
    // Predicated region
    $region30: #{stacked_lstm_decode.1} parent=1 // pred_check
      _
    $region31: #{stacked_lstm_decode.1} parent=1 // pred_check_branch
      %73 = sbr.rel (0) target = $region33
    $region32: #{stacked_lstm_decode.1} parent=1 // pred_region
      %75 = dma.done [#allocation7], 512
    $region33: #{stacked_lstm_decode.1} parent=1 // pred_fallthru
      _
    // Predicated region
    $region34: #{stacked_lstm_decode.1} parent=1 // pred_check
      _
    $region35: #{stacked_lstm_decode.1} parent=1 // pred_check_branch
      %77 = sbr.rel (0) target = $region37
    $region36: #{stacked_lstm_decode.1} parent=1 // pred_region
      %79 = dma.done [#allocation10], 512
    $region37: #{stacked_lstm_decode.1} parent=1 // pred_fallthru
      _
    %p81 = scmp.eq.s32.totalorder 0, 0
    // Predicated region
    $region38: #{stacked_lstm_decode.1} parent=1 // pred_check
      %p82 = pneg %p81
    $region39: #{stacked_lstm_decode.1} parent=1 // pred_check_branch
      %84 = sbr.rel (%p82) target = $region41
    $region40: #{stacked_lstm_decode.1} parent=1 // pred_region
      %v85 = vld [vmem:[#allocation6] sm:$0xf]
      %vm86 = vcmask 257024
      %87 = vst.msk [vmem:[#allocation2] sm:$0xf] %vm86, %v85
    $region41: #{stacked_lstm_decode.1} parent=1 // pred_fallthru
      _
    %v88 = vld [vmem:[#allocation3] sm:$0xf]
    %v89 = vpack.c.bf16 %v88, %v88
    %v90 = vld [vmem:[#allocation9] sm:$0xff]
    %v91 = vld [vmem:[#allocation9 + $0x8] sm:$0xff]
    %v92 = vld [vmem:[#allocation9 + $0x10] sm:$0xff]
    %v93 = vld [vmem:[#allocation9 + $0x18] sm:$0xff]
    %v98 = vunpack.c.l.b16 %v90
    %v99 = vunpack.c.h.b16 %v90
    %v100 = vunpack.c.l.b16 %v91
    %v101 = vunpack.c.h.b16 %v91
    %v102 = vunpack.c.l.b16 %v92
    %v103 = vunpack.c.h.b16 %v92
    %v104 = vunpack.c.l.b16 %v93
    %v105 = vunpack.c.h.b16 %v93
    %v106 = vpack.c.b16 %v100, %v98
    %v107 = vpack.c.b16 %v101, %v99
    %v108 = vpack.c.b16 %v104, %v102
    %v109 = vpack.c.b16 %v105, %v103
    %vm114 = vcmask 261120
    %v116 = vsel %vm114, %v89, 0
    %118 = vmatpush.bf16.msra.mxu0 0
    %119 = vmatpush.bf16.msra.mxu0 0
    %120 = vmatpush.bf16.msra.mxu0 0
    %121 = vmatpush.bf16.msra.mxu0 0
    %122 = vmatpush.bf16.msra.mxu0 0
    %123 = vmatpush.bf16.msra.mxu0 0
    %124 = vmatpush.bf16.msra.mxu0 %v108
    %125 = vmatpush.bf16.msra.mxu0 %v106
    %126 = vmatmul.bf16.gmra.mxu0 %v116
    %v127 = vpop.f32.mrf.mxu0
    %v128 = vadd.f32 0.0, %v127
    %v129 = vpop.f32.mrf.mxu0
    %130 = vdwg.mxu0
    %131 = vmatpush.bf16.msra.mxu0 0
    %132 = vmatpush.bf16.msra.mxu0 0
    %133 = vmatpush.bf16.msra.mxu0 0
    %134 = vmatpush.bf16.msra.mxu0 0
    %135 = vmatpush.bf16.msra.mxu0 0
    %136 = vmatpush.bf16.msra.mxu0 0
    %137 = vmatpush.bf16.msra.mxu0 %v109
    %138 = vmatpush.bf16.msra.mxu0 %v107
    %139 = vmatmul.bf16.gmra.mxu0 %v116
    %v140 = vpop.f32.mrf.mxu0
    %v141 = vadd.f32 0.0, %v140
    %v142 = vpop.f32.mrf.mxu0
    %143 = vdwg.mxu0
    %v144 = vld [vmem:[#allocation2] sm:$0xf]
    %v145 = vpack.c.bf16 %v144, %v144
    %v146 = vld [vmem:[#allocation8] sm:$0xf]
    %v147 = vld [vmem:[#allocation8 + $0x4] sm:$0xf]
    %v148 = vld [vmem:[#allocation8 + $0x8] sm:$0xf]
    %v149 = vld [vmem:[#allocation8 + $0xc] sm:$0xf]
    %v154 = vunpack.c.l.b16 %v146
    %v155 = vunpack.c.l.b16 %v147
    %v156 = vunpack.c.l.b16 %v148
    %v157 = vunpack.c.l.b16 %v149
    %v158 = vpack.c.b16 %v155, %v154
    %v159 = vpack.c.b16 %v157, %v156
    %v163 = vsel %vm114, %v145, 0
    %165 = vmatpush.bf16.msra.mxu0 0
    %166 = vmatpush.bf16.msra.mxu0 0
    %167 = vmatpush.bf16.msra.mxu0 0
    %168 = vmatpush.bf16.msra.mxu0 0
    %169 = vmatpush.bf16.msra.mxu0 0
    %170 = vmatpush.bf16.msra.mxu0 0
    %171 = vmatpush.bf16.msra.mxu0 %v159
    %172 = vmatpush.bf16.msra.mxu0 %v158
    %173 = vmatmul.bf16.gmra.mxu0 %v163
    %v174 = vpop.f32.mrf.mxu0
    %v175 = vadd.f32 %v128, %v174
    %v176 = vpop.f32.mrf.mxu0
    %177 = vdwg.mxu0
    %v178 = vld [vmem:[%s4] sm:$0x1]
    %v180 = vperm.slane %v178, 0
    %v182 = vadd.f32 %v175, %v180
    %v183 = vxor.u32 %v182, 2147483648
    %v184 = vmul.f32 %v183, 1.442695
    %v185 = vpow.pop %v184
    %v186 = vadd.f32 %v185, 1.0
    %v187 = vrcp.pop %v186
    %v188 = vmul.f32 %v186, %v187
    %v189 = vsub.f32 1.0, %v188
    %v190 = vmul.f32 %v187, %v189
    %v191 = vadd.f32 %v187, %v190
    %vm192 = vweird.f32 %v186
    %vm193 = vweird.f32 %v187
    %vm194 = vmor %vm192, %vm193
    %v195 = vsel %vm194, %v187, %v191
    %v196 = vand.u32 2147483647, %v186
    %vm197 = vcmp.eq.f32.partialorder %v196, 8.507059e+37
    %v198 = vand.u32 %v186, 2147483648
    %v199 = vor.u32 1.1754944e-38, %v198
    %v200 = vsel %vm197, %v199, %v195
    %v201 = vmul.f32 1.0, %v200
    %v202 = vtanh.pop %v182
    %204 = vrot.lane.b32.xlu0 %v144, 32
    %v205 = vpop.permute.xlu0 %204
    %v207 = vmul.f32 %v201, %v205
    %209 = vrot.lane.b32.xlu0 %v202, 64
    %v210 = vpop.permute.xlu0 %209
    %v212 = vmul.f32 %v201, %v210
    %214 = vrot.lane.b32.xlu0 %v212, 32
    %v215 = vpop.permute.xlu0 %214
    %v217 = vadd.f32 %v207, %v215
    %v218 = vtanh.pop %v217
    %220 = vrot.lane.b32.xlu0 %v218, 64
    %v221 = vpop.permute.xlu0 %220
    %v223 = vmul.f32 %v201, %v221
    %v224 = vpack.c.bf16 %v223, %v223
    %s225 = scalar_lea.vmem [#allocation8], 16
    %v226 = vld [vmem:[%s225] sm:$0xf]
    %v227 = vld [vmem:[%s225 + $0x4] sm:$0xf]
    %v228 = vld [vmem:[%s225 + $0x8] sm:$0xf]
    %v229 = vld [vmem:[%s225 + $0xc] sm:$0xf]
    %231 = vrot.lane.b32.xlu0 %v224, 32
    %v232 = vpop.permute.xlu0 %231
    %v237 = vunpack.c.l.b16 %v226
    %v238 = vunpack.c.l.b16 %v227
    %v239 = vunpack.c.l.b16 %v228
    %v240 = vunpack.c.l.b16 %v229
    %v241 = vpack.c.b16 %v238, %v237
    %v242 = vpack.c.b16 %v240, %v239
    %v246 = vsel %vm114, %v232, 0
    %248 = vmatpush.bf16.msra.mxu0 0
    %249 = vmatpush.bf16.msra.mxu0 0
    %250 = vmatpush.bf16.msra.mxu0 0
    %251 = vmatpush.bf16.msra.mxu0 0
    %252 = vmatpush.bf16.msra.mxu0 0
    %253 = vmatpush.bf16.msra.mxu0 0
    %254 = vmatpush.bf16.msra.mxu0 %v242
    %255 = vmatpush.bf16.msra.mxu0 %v241
    %256 = vmatmul.bf16.gmra.mxu0 %v246
    %v257 = vpop.f32.mrf.mxu0
    %v258 = vadd.f32 %v141, %v257
    %v259 = vpop.f32.mrf.mxu0
    %260 = vdwg.mxu0
    %s261 = scalar_lea.vmem %s4, 1
    %v262 = vld [vmem:[%s261] sm:$0x1]
    %v264 = vperm.slane %v262, 0
    %v266 = vadd.f32 %v258, %v264
    %v267 = vxor.u32 %v266, 2147483648
    %v268 = vmul.f32 %v267, 1.442695
    %v269 = vpow.pop %v268
    %v270 = vadd.f32 %v269, 1.0
    %v271 = vrcp.pop %v270
    %v272 = vmul.f32 %v270, %v271
    %v273 = vsub.f32 1.0, %v272
    %v274 = vmul.f32 %v271, %v273
    %v275 = vadd.f32 %v271, %v274
    %vm276 = vweird.f32 %v270
    %vm277 = vweird.f32 %v271
    %vm278 = vmor %vm276, %vm277
    %v279 = vsel %vm278, %v271, %v275
    %v280 = vand.u32 2147483647, %v270
    %vm281 = vcmp.eq.f32.partialorder %v280, 8.507059e+37
    %v282 = vand.u32 %v270, 2147483648
    %v283 = vor.u32 1.1754944e-38, %v282
    %v284 = vsel %vm281, %v283, %v279
    %v285 = vmul.f32 1.0, %v284
    %v286 = vtanh.pop %v266
    %288 = vrot.lane.b32.xlu0 %v223, 64
    %v289 = vpop.permute.xlu0 %288
    %v291 = vmul.f32 %v285, %v289
    %293 = vrot.lane.b32.xlu0 %v286, 64
    %v294 = vpop.permute.xlu0 %293
    %v296 = vmul.f32 %v285, %v294
    %298 = vrot.lane.b32.xlu0 %v296, 32
    %v299 = vpop.permute.xlu0 %298
    %v301 = vadd.f32 %v291, %v299
    %v302 = vtanh.pop %v301
    %304 = vrot.lane.b32.xlu0 %v302, 64
    %v305 = vpop.permute.xlu0 %304
    %v307 = vmul.f32 %v285, %v305
    %309 = vrot.lane.b32.xlu0 %v307, 32
    %v310 = vpop.permute.xlu0 %309
    %vm312 = vcmask 257024
    %313 = vst.msk [vmem:[#allocation2] sm:$0xf] %vm312, %v310
    %314 = vst.msk [vmem:[#allocation11] sm:$0xf] %vm312, %v310
    // Predicated region
    $region42: #{stacked_lstm_decode.1} parent=1 // pred_check
      _
    $region43: #{stacked_lstm_decode.1} parent=1 // pred_check_branch
      %316 = sbr.rel (0) target = $region45
    $region44: #{stacked_lstm_decode.1} parent=1 // pred_region
      %318 = vsyncadd [#allocation5], 0
      %s320 = sshll.u32 [#allocation11], 4
      %s321 = int_to_ptr.vmem [resolvable:$true] %s320
      %s322 = sshll.u32 %s5, 4
      %s323 = int_to_ptr.hbm [resolvable:$true] %s322
      %325 = dma.vmem_to_hbm [thread:$0]  %s321, 64, %s323, [#allocation5]
    $region45: #{stacked_lstm_decode.1} parent=1 // pred_fallthru
      _
    // Predicated region
    $region46: #{stacked_lstm_decode.1} parent=1 // pred_check
      _
    $region47: #{stacked_lstm_decode.1} parent=1 // pred_check_branch
      %327 = sbr.rel (0) target = $region49
    $region48: #{stacked_lstm_decode.1} parent=1 // pred_region
      %329 = dma.done [#allocation5], 64
    $region49: #{stacked_lstm_decode.1} parent=1 // pred_fallthru
      _
    %330 = vsyncpa [#allocation4], 1
    %331 = vsyncpa [#allocation7], 1
    %332 = vsyncpa [#allocation10], 1
    %333 = vsyncpa [#allocation5], 1

</llo_original>
